<compile_context>
chip_gen: v6e
topology: v6e:2x2x1
jax: 0.10.0
libtpu: 0.0.40
codegen_flags: <defaults>
</compile_context>

<pallas_src>
import functools

import jax
import jax.numpy as jnp
from jax.experimental import pallas as pl
from jax.experimental.pallas import tpu as pltpu

LANES = 128
SUBLANES = 8
MAX_TILE_ROWS = 4096          # 4096 * 128 * 4 B = 2 MiB per f32 input block


def _focal_terms(x, t, alpha, gamma, recip):
    """Per-element weighted focal loss (binary 0/1 targets). x, t are float32."""
    # Numerically stable BCE-with-logits sharing one transcendental e:
    #   bce = relu(x) - x*t + log1p(exp(-|x|))
    e = jnp.exp(-jnp.abs(x))
    bce = jnp.maximum(x, 0.0) - x * t + jnp.log1p(e)
    # pt = exp(-bce).  For binary targets pt == sigmoid(x) when t == 1 and
    # 1 - sigmoid(x) when t == 0, so it can be rebuilt from the shared e
    # without a second EUP exp (review: v6e/v7x are EUP/compute-bound here).
    r = recip(1.0 + e)                          # exact (approx breaks 1e-5 tol)
    s = jnp.where(x >= 0.0, r, e * r)           # sigmoid(x)
    pt = (1.0 - t) + (2.0 * t - 1.0) * s        # the select written as one FMA
    # at = alpha_table[t.long()] for binary targets == alpha + (1 - 2*alpha)*t
    at = jnp.float32(alpha) + jnp.float32(1.0 - 2.0 * alpha) * t
    omp = 1.0 - pt
    if float(gamma) == 2.0:
        focal = omp * omp                       # avoid pow lowering for default
    else:
        focal = jnp.maximum(omp, 0.0) ** gamma
    return at * focal * bce


def _focal_loss_kernel(x_ref, t_ref, o_ref, acc_ref, *, alpha, gamma, n_rows):
    i = pl.program_id(0)                        # "parallel" axis (2-way if free)
    j = pl.program_id(1)                        # reduction axis
    nj = pl.num_programs(1)
    tile_rows = x_ref.shape[0]

    @pl.when(j == 0)
    def _init():
        acc_ref[...] = jnp.zeros_like(acc_ref)

    x = x_ref[...].astype(jnp.float32)
    t = t_ref[...].astype(jnp.float32)
    f_loss = _focal_terms(x, t, alpha, gamma, lambda v: pl.reciprocal(v))

    def _accumulate(v):
        # Full-vreg VALU-only accumulation into the (8, LANES) accumulator;
        # the cross-sublane/lane reduction happens once, in the wrapper.
        acc_ref[...] += v.reshape(-1, SUBLANES, LANES).sum(axis=0)

    lin = i * nj + j                            # linear block index over rows
    if n_rows % tile_rows == 0:
        _accumulate(f_loss)                     # common path: all blocks full
    else:
        n_blocks = pl.num_programs(0) * nj

        @pl.when(lin < n_blocks - 1)
        def _full():
            _accumulate(f_loss)

        @pl.when(lin == n_blocks - 1)
        def _ragged_last():                     # mask rows past n_rows
            rr = jax.lax.broadcasted_iota(jnp.int32, f_loss.shape, 0)
            valid = n_rows - lin * tile_rows
            _accumulate(jnp.where(rr < valid, f_loss, 0.0))

    @pl.when(j == nj - 1)
    def _finalize():
        o_ref[...] = acc_ref[...][None]         # (1, SUBLANES, LANES) partial


def weighted_focal_loss(inputs, targets, alpha=0.25, gamma=2):
    """Mean weighted focal loss over all elements.

    NOTE: like the original PyTorch module (size-2 alpha table indexed with
    targets.long()), this assumes targets take binary 0/1 values.
    """
    n = inputs.size
    if n == 0:
        return jnp.float32(jnp.nan)             # torch mean() of empty is nan
    assert n < 2**31, "int32 index arithmetic requires < 2**31 elements"
    alpha = float(alpha)

    x = inputs
    if x.dtype not in (jnp.float32, jnp.bfloat16, jnp.float16):
        x = x.astype(jnp.float32)
    t = targets
    if t.dtype == jnp.bool_:
        t = t.astype(jnp.int8)                  # keep target HBM stream at 1 B
    # other integer / float target dtypes stream through unconverted and are
    # cast to f32 inside the kernel -> no extra full-array pass in HBM.

    # Kernel handles the (8*128)-aligned prefix; the < 1024-element remainder
    # is a tiny jnp epilogue (no full-array pad/copy in the wrapper).
    rows = (n // (SUBLANES * LANES)) * SUBLANES
    n_main = rows * LANES
    rem = n - n_main

    tail_sum = jnp.float32(0.0)
    if rem:
        x_tail = x.reshape(-1)[n_main:].astype(jnp.float32)
        t_tail = t.reshape(-1)[n_main:].astype(jnp.float32)
        tail_sum = jnp.sum(
            _focal_terms(x_tail, t_tail, alpha, gamma, lambda v: 1.0 / v))

    if rows == 0:                               # tiny input: epilogue did it all
        return tail_sum / jnp.float32(n)

    if rem:
        x2 = x.reshape(-1)[:n_main].reshape(rows, LANES)
        t2 = t.reshape(-1)[:n_main].reshape(rows, LANES)
    else:
        x2 = x.reshape(rows, LANES)
        t2 = t.reshape(rows, LANES)

    # Tile: largest multiple of 32 rows (f32/bf16/int8 sublane packing) up to
    # MAX_TILE_ROWS; small inputs use one full-array block (legal: equals dims).
    if rows >= 32:
        tile_rows = min(MAX_TILE_ROWS, (rows // 32) * 32)
    else:
        tile_rows = rows                        # multiple of 8, equals full dim
    n_blocks = pl.cdiv(rows, tile_rows)

    # 2-way leading split only when it generates no padding-only blocks.
    if n_blocks >= 2 and n_blocks % 2 == 0:
        npar, nj = 2, n_blocks // 2
    else:
        npar, nj = 1, n_blocks
    # TODO(synk): on v7x, use pltpu.CORE_PARALLEL (or pl.core_map over a 2-core
    # mesh) on the leading axis to guarantee the dual-TensorCore split; plain
    # "parallel" is kept here for portability to single-core v5e/v6e.

    kernel = functools.partial(_focal_loss_kernel, alpha=alpha, gamma=gamma,
                               n_rows=int(rows))

    in_spec = pl.BlockSpec((tile_rows, LANES), lambda i, j: (i * nj + j, 0))
    out_spec = pl.BlockSpec((1, SUBLANES, LANES), lambda i, j: (i, 0, 0))

    # VMEM limit from the actual footprint (double-buffered inputs + f32
    # elementwise temporaries), capped well under v7x's 64 MiB.
    blk = tile_rows * LANES
    vmem_limit = 2 * blk * (x2.dtype.itemsize + t2.dtype.itemsize)
    vmem_limit += 10 * blk * 4                  # f32 temporaries headroom
    vmem_limit += 2 << 20                       # accumulator / misc
    vmem_limit = max(16 << 20, min(int(vmem_limit), 40 << 20))

    bytes_accessed = int(n_main * (x2.dtype.itemsize + t2.dtype.itemsize)
                         + npar * SUBLANES * LANES * 4)

    partials = pl.pallas_call(
        kernel,
        out_shape=jax.ShapeDtypeStruct((npar, SUBLANES, LANES), jnp.float32),
        grid_spec=pltpu.PrefetchScalarGridSpec(
            num_scalar_prefetch=0,
            grid=(npar, nj),
            in_specs=[in_spec, in_spec],
            out_specs=out_spec,
            scratch_shapes=[pltpu.VMEM((SUBLANES, LANES), jnp.float32)],
        ),
        compiler_params=pltpu.CompilerParams(
            dimension_semantics=("parallel", "arbitrary"),
            vmem_limit_bytes=vmem_limit,
        ),
        cost_estimate=pl.CostEstimate(
            flops=int(16 * n_main),
            transcendentals=int(2 * n_main),
            bytes_accessed=bytes_accessed,
        ),
    )(x2, t2)

    # Tiny cross-sublane/lane/core reduction + mean over the true element count.
    return (jnp.sum(partials) + tail_sum) / jnp.float32(n)


def _reference(inputs, targets, alpha=0.25, gamma=2):
    x = inputs.reshape(-1).astype(jnp.float32)
    t = targets.reshape(-1).astype(jnp.float32)
    bce = jnp.maximum(x, 0.0) - x * t + jnp.log1p(jnp.exp(-jnp.abs(x)))
    at = jnp.where(t.astype(jnp.int32) == 0, alpha, 1.0 - alpha)
    pt = jnp.exp(-bce)
    return jnp.mean(at * (1.0 - pt) ** gamma * bce)


if __name__ == "__main__":
    key = jax.random.PRNGKey(0)
    k1, k2, k3, k4 = jax.random.split(key, 4)

    # NCHW logits and binary 0/1 (float) targets, small shapes.
    B, C, H, W = 2, 4, 16, 16
    inputs = jax.random.normal(k1, (B, C, H, W), dtype=jnp.float32)
    targets = jax.random.bernoulli(k2, 0.3, (B, C, H, W)).astype(jnp.float32)

    loss = jax.block_until_ready(weighted_focal_loss(inputs, targets,
                                                     alpha=0.25, gamma=2))
    ref = _reference(inputs, targets, alpha=0.25, gamma=2)
    assert jnp.allclose(loss, ref, rtol=1e-5, atol=1e-6), (loss, ref)

    # Ragged size (2079 elements) exercising the tiny jnp tail epilogue.
    shape2 = (3, 7, 9, 11)
    x_r = jax.random.normal(k3, shape2, dtype=jnp.float32)
    t_r = jax.random.bernoulli(k4, 0.5, shape2).astype(jnp.float32)
    loss_r = jax.block_until_ready(weighted_focal_loss(x_r, t_r))
    ref_r = _reference(x_r, t_r)
    assert jnp.allclose(loss_r, ref_r, rtol=1e-5, atol=1e-6), (loss_r, ref_r)

    print("KERNEL_OK")
</pallas_src>

<mosaic_0001>
module attributes {stable_mosaic.version = 11 : i64} {
  func.func @_focal_loss_kernel(%arg0: i32, %arg1: i32, %arg2: memref<16x128xf32, #tpu.memory_space<vmem>>, %arg3: memref<16x128xf32, #tpu.memory_space<vmem>>, %arg4: memref<1x8x128xf32, #tpu.memory_space<vmem>>, %arg5: memref<8x128xf32, #tpu.memory_space<vmem>>) attributes {dimension_semantics = [#tpu.dimension_semantics<parallel>, #tpu.dimension_semantics<arbitrary>], iteration_bounds = array<i64: 1, 1>, scalar_prefetch = 0 : i64, scratch_operands = 1 : i64, tpu.core_type = #tpu.core_type<tc>, window_params = [{transform_indices = @transform_0, window_bounds = array<i64: 16, 128>}, {transform_indices = @transform_1, window_bounds = array<i64: 16, 128>}, {transform_indices = @transform_2, window_bounds = array<i64: 1, 8, 128>}]} {
    %c0_i32 = arith.constant 0 : i32
    %0 = arith.cmpi eq, %arg1, %c0_i32 : i32
    %1 = arith.extui %0 : i1 to i32
    %c0_i32_0 = arith.constant 0 : i32
    %2 = arith.cmpi ne, %1, %c0_i32_0 : i32
    scf.if %2 {
      %cst_20 = arith.constant 0.000000e+00 : f32
      %47 = vector.broadcast %cst_20 : f32 to vector<8x128xf32>
      %c0_21 = arith.constant 0 : index
      %c0_22 = arith.constant 0 : index
      %48 = vector.load %arg5[%c0_21, %c0_22] : memref<8x128xf32, #tpu.memory_space<vmem>>, vector<8x128xf32>
      tpu.vector_store %arg5[%c0_21, %c0_22], %47 {strides = array<i32>} : memref<8x128xf32, #tpu.memory_space<vmem>>, vector<8x128xf32>,
    } else {
    }
    %c0 = arith.constant 0 : index
    %c0_1 = arith.constant 0 : index
    %3 = vector.load %arg2[%c0, %c0_1] : memref<16x128xf32, #tpu.memory_space<vmem>>, vector<16x128xf32>
    %c0_2 = arith.constant 0 : index
    %c0_3 = arith.constant 0 : index
    %4 = vector.load %arg3[%c0_2, %c0_3] : memref<16x128xf32, #tpu.memory_space<vmem>>, vector<16x128xf32>
    %5 = math.absf %3 : vector<16x128xf32>
    %cst = arith.constant 0.000000e+00 : f32
    %6 = vector.broadcast %cst : f32 to vector<16x128xf32>
    %7 = arith.subf %6, %5 : vector<16x128xf32>
    %8 = math.exp %7 : vector<16x128xf32>
    %cst_4 = arith.constant 0.000000e+00 : f32
    %9 = vector.broadcast %cst_4 : f32 to vector<16x128xf32>
    %10 = arith.maximumf %3, %9 : vector<16x128xf32>
    %11 = arith.mulf %3, %4 : vector<16x128xf32>
    %12 = arith.subf %10, %11 : vector<16x128xf32>
    %13 = math.log1p %8 : vector<16x128xf32>
    %14 = arith.addf %12, %13 : vector<16x128xf32>
    %cst_5 = arith.constant 1.000000e+00 : f32
    %15 = vector.broadcast %cst_5 : f32 to vector<16x128xf32>
    %16 = arith.addf %15, %8 : vector<16x128xf32>
    %17 = tpu.reciprocal %16 : vector<16x128xf32> -> vector<16x128xf32>
    %cst_6 = arith.constant 0.000000e+00 : f32
    %18 = vector.broadcast %cst_6 : f32 to vector<16x128xf32>
    %19 = arith.cmpf oge, %3, %18 : vector<16x128xf32>
    %20 = arith.mulf %8, %17 : vector<16x128xf32>
    %21 = arith.select %19, %17, %20 : vector<16x128xi1>, vector<16x128xf32>
    %cst_7 = arith.constant 1.000000e+00 : f32
    %22 = vector.broadcast %cst_7 : f32 to vector<16x128xf32>
    %23 = arith.subf %22, %4 : vector<16x128xf32>
    %cst_8 = arith.constant 2.000000e+00 : f32
    %24 = vector.broadcast %cst_8 : f32 to vector<16x128xf32>
    %25 = arith.mulf %24, %4 : vector<16x128xf32>
    %cst_9 = arith.constant 1.000000e+00 : f32
    %26 = vector.broadcast %cst_9 : f32 to vector<16x128xf32>
    %27 = arith.subf %25, %26 : vector<16x128xf32>
    %28 = arith.mulf %27, %21 : vector<16x128xf32>
    %29 = arith.addf %23, %28 : vector<16x128xf32>
    %cst_10 = arith.constant 5.000000e-01 : f32
    %30 = vector.broadcast %cst_10 : f32 to vector<16x128xf32>
    %31 = arith.mulf %30, %4 : vector<16x128xf32>
    %cst_11 = arith.constant 2.500000e-01 : f32
    %32 = vector.broadcast %cst_11 : f32 to vector<16x128xf32>
    %33 = arith.addf %32, %31 : vector<16x128xf32>
    %cst_12 = arith.constant 1.000000e+00 : f32
    %34 = vector.broadcast %cst_12 : f32 to vector<16x128xf32>
    %35 = arith.subf %34, %29 : vector<16x128xf32>
    %36 = arith.mulf %35, %35 : vector<16x128xf32>
    %37 = arith.mulf %33, %36 : vector<16x128xf32>
    %38 = arith.mulf %37, %14 : vector<16x128xf32>
    %c0_13 = arith.constant 0 : index
    %c0_14 = arith.constant 0 : index
    %39 = vector.load %arg5[%c0_13, %c0_14] : memref<8x128xf32, #tpu.memory_space<vmem>>, vector<8x128xf32>
    %40 = vector.shape_cast %38 : vector<16x128xf32> to vector<2x8x128xf32>
    %cst_15 = arith.constant dense<0.000000e+00> : vector<8x128xf32>
    %41 = vector.multi_reduction <add>, %40, %cst_15 [0] : vector<2x8x128xf32> to vector<8x128xf32>
    %42 = arith.addf %39, %41 : vector<8x128xf32>
    %c0_16 = arith.constant 0 : index
    %c0_17 = arith.constant 0 : index
    %43 = vector.load %arg5[%c0_16, %c0_17] : memref<8x128xf32, #tpu.memory_space<vmem>>, vector<8x128xf32>
    tpu.vector_store %arg5[%c0_16, %c0_17], %42 {strides = array<i32>} : memref<8x128xf32, #tpu.memory_space<vmem>>, vector<8x128xf32>,
    %c0_i32_18 = arith.constant 0 : i32
    %44 = arith.cmpi eq, %arg1, %c0_i32_18 : i32
    %45 = arith.extui %44 : i1 to i32
    %c0_i32_19 = arith.constant 0 : i32
    %46 = arith.cmpi ne, %45, %c0_i32_19 : i32
    scf.if %46 {
      %c0_20 = arith.constant 0 : index
      %c0_21 = arith.constant 0 : index
      %47 = vector.load %arg5[%c0_20, %c0_21] : memref<8x128xf32, #tpu.memory_space<vmem>>, vector<8x128xf32>
      %48 = vector.shape_cast %47 : vector<8x128xf32> to vector<1x8x128xf32>
      %c0_22 = arith.constant 0 : index
      %c0_23 = arith.constant 0 : index
      %c0_24 = arith.constant 0 : index
      %49 = vector.load %arg4[%c0_22, %c0_23, %c0_24] : memref<1x8x128xf32, #tpu.memory_space<vmem>>, vector<1x8x128xf32>
      tpu.vector_store %arg4[%c0_22, %c0_23, %c0_24], %48 {strides = array<i32>} : memref<1x8x128xf32, #tpu.memory_space<vmem>>, vector<1x8x128xf32>,
    } else {
    }
    return
  }
  func.func @transform_0(%arg0: i32, %arg1: i32) -> (i32, i32) {
    %c1_i32 = arith.constant 1 : i32
    %0 = arith.muli %arg0, %c1_i32 : i32
    %1 = arith.addi %0, %arg1 : i32
    %c0_i32 = arith.constant 0 : i32
    %c0_i32_0 = arith.constant 0 : i32
    return %1, %c0_i32 : i32, i32
  }
  func.func @transform_1(%arg0: i32, %arg1: i32) -> (i32, i32) {
    %c1_i32 = arith.constant 1 : i32
    %0 = arith.muli %arg0, %c1_i32 : i32
    %1 = arith.addi %0, %arg1 : i32
    %c0_i32 = arith.constant 0 : i32
    %c0_i32_0 = arith.constant 0 : i32
    return %1, %c0_i32 : i32, i32
  }
  func.func @transform_2(%arg0: i32, %arg1: i32) -> (i32, i32, i32) {
    %c0_i32 = arith.constant 0 : i32
    %c0_i32_0 = arith.constant 0 : i32
    %c0_i32_1 = arith.constant 0 : i32
    return %arg0, %c0_i32, %c0_i32_0 : i32, i32, i32
  }
}

</mosaic_0001>

<llo_original>
// kernel: tpu_custom_call.1
$region0: #{tpu_custom_call.1}
  #allocation0 [shape = 'u32[]', space=smem, size = 0x4, offset = 0x4, fixed_abs, tag = 'smem constant byte address 0x4 - core index']
  #allocation1 [shape = 'u32[144,128]{1,0:T(1,128)}', space=vmem, size = 0x12000, scoped, tag = 'internal scratch']
  #allocation2 [shape = 'f32[8,128]{1,0:T(8,128)}', space=vmem, size = 0x1000, scoped, tag = 'scratch operand']
  %s0 = inlined_call_operand.hbm [shape: f32[16,128], index: 0, kind: input, shape index: {}]
  %s1 = inlined_call_operand.hbm [shape: f32[16,128], index: 1, kind: input, shape index: {}]
  %s2 = inlined_call_operand.hbm [shape: f32[1,8,128], index: 2, kind: output, shape index: {}]
  %s3 = sld [smem:[#allocation0]]
  $region34: #{tpu_custom_call.1} parent=0
    _
  %s5 = ssub.s32 1, %s3
  %s6 = scalar_select 0, %s5, %s3
  $region1: #{tpu_custom_call.1} parent=0
    #allocation3 [shape = 'u8[8192]{0}', space=vmem, size = 0x2000, scoped, tag = 'input window, operand 0, single buffered']
    #allocation4 [shape = 's32[1]{0}', space=sflag, size = 0x4, scoped, tag = 'scoped memory for tpu_custom_call.1']
    #allocation5 [shape = 's32[1]{0}', space=sflag, size = 0x4, scoped, tag = 'scoped memory for tpu_custom_call.1']
    #allocation6 [shape = 'u8[8192]{0}', space=vmem, size = 0x2000, scoped, tag = 'input window, operand 1, single buffered']
    #allocation7 [shape = 's32[1]{0}', space=sflag, size = 0x4, scoped, tag = 'scoped memory for tpu_custom_call.1']
    #allocation8 [shape = 'u8[4096]{0}', space=vmem, size = 0x1000, scoped, tag = 'output window, operand 0, single buffered']
    %7 = vsyncpa [#allocation4], 0
    %8 = vsyncpa [#allocation7], 0
    %9 = vsyncpa [#allocation5], 0
    // Predicated region
    $region2: #{tpu_custom_call.1} parent=1 // pred_check
      _
    $region3: #{tpu_custom_call.1} parent=1 // pred_check_branch
      %11 = sbr.rel (0) target = $region5
    $region4: #{tpu_custom_call.1} parent=1 // pred_region
      %s12 = sadd.s32 0, 0
      %s13 = smul.u32 2, %s12
      %s15 = ssub.s32 256, 256
      %16 = vsyncadd [#allocation4], %s15
      %s17 = smul.addr %s13, 128
      %s18 = scalar_lea.hbm %s0, %s17
      %s19 = sshll.u32 [#allocation3], 4
      %s20 = int_to_ptr.vmem [resolvable:$true] %s19
      %25 = dma.hbm_to_vmem [thread:$0]  %s18, 256, %s20, [#allocation4], 128, 128, 8
    $region5: #{tpu_custom_call.1} parent=1 // pred_fallthru
      _
    // Predicated region
    $region6: #{tpu_custom_call.1} parent=1 // pred_check
      _
    $region7: #{tpu_custom_call.1} parent=1 // pred_check_branch
      %27 = sbr.rel (0) target = $region9
    $region8: #{tpu_custom_call.1} parent=1 // pred_region
      %s28 = sadd.s32 0, 0
      %s29 = smul.u32 2, %s28
      %s31 = ssub.s32 256, 256
      %32 = vsyncadd [#allocation7], %s31
      %s33 = smul.addr %s29, 128
      %s34 = scalar_lea.hbm %s1, %s33
      %s35 = sshll.u32 [#allocation6], 4
      %s36 = int_to_ptr.vmem [resolvable:$true] %s35
      %41 = dma.hbm_to_vmem [thread:$0]  %s34, 256, %s36, [#allocation7], 128, 128, 8
    $region9: #{tpu_custom_call.1} parent=1 // pred_fallthru
      _
    // Predicated region
    $region10: #{tpu_custom_call.1} parent=1 // pred_check
      _
    $region11: #{tpu_custom_call.1} parent=1 // pred_check_branch
      %43 = sbr.rel (0) target = $region13
    $region12: #{tpu_custom_call.1} parent=1 // pred_region
      %44 = dma.done [#allocation4], 256
    $region13: #{tpu_custom_call.1} parent=1 // pred_fallthru
      _
    // Predicated region
    $region14: #{tpu_custom_call.1} parent=1 // pred_check
      _
    $region15: #{tpu_custom_call.1} parent=1 // pred_check_branch
      %46 = sbr.rel (0) target = $region17
    $region16: #{tpu_custom_call.1} parent=1 // pred_region
      %47 = dma.done [#allocation7], 256
    $region17: #{tpu_custom_call.1} parent=1 // pred_fallthru
      _
    %s48 = sadd.s32 0, 0
    %s49 = smul.u32 2, %s48
    %s50 = sadd.s32 0, 0
    %s51 = smul.u32 2, %s50
    %p52 = scmp.eq.s32.totalorder 0, 0
    // Predicated region
    $region18: #{tpu_custom_call.1} parent=1 // pred_check
      %p53 = pneg %p52
    $region19: #{tpu_custom_call.1} parent=1 // pred_check_branch
      %55 = sbr.rel (%p53) target = $region21
    $region20: #{tpu_custom_call.1} parent=1 // pred_region
      %56 = vst [vmem:[#allocation2] sm:$0xff] 0.0
    $region21: #{tpu_custom_call.1} parent=1 // pred_fallthru
      _
    %v57 = vld [vmem:[#allocation3] sm:$0xff]
    %v58 = vld [vmem:[#allocation3 + $0x8] sm:$0xff]
    %v59 = vld [vmem:[#allocation6] sm:$0xff]
    %v60 = vld [vmem:[#allocation6 + $0x8] sm:$0xff]
    %v61 = vand.u32 2147483647, %v57
    %v62 = vand.u32 2147483647, %v58
    %v63 = vsub.f32 0.0, %v61
    %v64 = vsub.f32 0.0, %v62
    %v65 = vmul.f32 %v63, 1.442695
    %v66 = vpow.pop %v65
    %v67 = vmul.f32 %v64, 1.442695
    %v68 = vpow.pop %v67
    %v69 = vmax.f32 %v57, 0.0
    %v70 = vmax.f32 %v58, 0.0
    %v71 = vmul.f32 %v57, %v59
    %v72 = vmul.f32 %v58, %v60
    %v73 = vsub.f32 %v69, %v71
    %v74 = vsub.f32 %v70, %v72
    %v75 = vadd.f32 %v66, 1.0
    %v76 = vlog2.pop %v75
    %v77 = vmul.f32 %v76, 0.6931472
    %v78 = vmul.f32 -0.5, %v66
    %v79 = vadd.f32 %v78, 1.0
    %v80 = vmul.f32 %v79, %v66
    %v81 = vand.u32 2147483647, %v66
    %vm82 = vcmp.lt.f32.partialorder %v81, 0.0004427343
    %v83 = vsel %vm82, %v80, %v77
    %v84 = vadd.f32 %v68, 1.0
    %v85 = vlog2.pop %v84
    %v86 = vmul.f32 %v85, 0.6931472
    %v87 = vmul.f32 -0.5, %v68
    %v88 = vadd.f32 %v87, 1.0
    %v89 = vmul.f32 %v88, %v68
    %v90 = vand.u32 2147483647, %v68
    %vm91 = vcmp.lt.f32.partialorder %v90, 0.0004427343
    %v92 = vsel %vm91, %v89, %v86
    %v93 = vadd.f32 %v73, %v83
    %v94 = vadd.f32 %v74, %v92
    %v95 = vadd.f32 %v66, 1.0
    %v96 = vadd.f32 %v68, 1.0
    %v97 = vrcp.pop %v95
    %v98 = vrcp.pop %v96
    %vm99 = vcmp.ge.f32.partialorder %v57, 0.0
    %vm100 = vcmp.ge.f32.partialorder %v58, 0.0
    %v101 = vmul.f32 %v66, %v97
    %v102 = vmul.f32 %v68, %v98
    %v103 = vsel %vm99, %v97, %v101
    %v104 = vsel %vm100, %v98, %v102
    %v105 = vsub.f32 1.0, %v59
    %v106 = vsub.f32 1.0, %v60
    %v107 = vmul.f32 %v59, 2.0
    %v108 = vmul.f32 %v60, 2.0
    %v109 = vsub.f32 %v107, 1.0
    %v110 = vsub.f32 %v108, 1.0
    %v111 = vmul.f32 %v109, %v103
    %v112 = vmul.f32 %v110, %v104
    %v113 = vadd.f32 %v105, %v111
    %v114 = vadd.f32 %v106, %v112
    %v115 = vmul.f32 %v59, 0.5
    %v116 = vmul.f32 %v60, 0.5
    %v117 = vadd.f32 %v115, 0.25
    %v118 = vadd.f32 %v116, 0.25
    %v119 = vsub.f32 1.0, %v113
    %v120 = vsub.f32 1.0, %v114
    %v121 = vmul.f32 %v119, %v119
    %v122 = vmul.f32 %v120, %v120
    %v123 = vmul.f32 %v117, %v121
    %v124 = vmul.f32 %v118, %v122
    %v125 = vmul.f32 %v123, %v93
    %v126 = vmul.f32 %v124, %v94
    %v127 = vld [vmem:[#allocation2] sm:$0xff]
    %v128 = vadd.f32 %v125, %v126
    %v129 = vadd.f32 %v127, %v128
    %130 = vst [vmem:[#allocation2] sm:$0xff] %v129
    // Predicated region
    $region22: #{tpu_custom_call.1} parent=1 // pred_check
      %p131 = pneg %p52
    $region23: #{tpu_custom_call.1} parent=1 // pred_check_branch
      %133 = sbr.rel (%p131) target = $region25
    $region24: #{tpu_custom_call.1} parent=1 // pred_region
      %v134 = vld [vmem:[#allocation2] sm:$0xff]
      %135 = vst [vmem:[#allocation8] sm:$0xff] %v134
    $region25: #{tpu_custom_call.1} parent=1 // pred_fallthru
      _
    // Predicated region
    $region26: #{tpu_custom_call.1} parent=1 // pred_check
      _
    $region27: #{tpu_custom_call.1} parent=1 // pred_check_branch
      %137 = sbr.rel (0) target = $region29
    $region28: #{tpu_custom_call.1} parent=1 // pred_region
      %s139 = ssub.s32 128, 128
      %140 = vsyncadd [#allocation5], %s139
      %s142 = sshll.u32 [#allocation8], 4
      %s143 = int_to_ptr.vmem [resolvable:$true] %s142
      %145 = dma.vmem_to_hbm [thread:$0]  %s143, 128, %s2, [#allocation5]
    $region29: #{tpu_custom_call.1} parent=1 // pred_fallthru
      _
    // Predicated region
    $region30: #{tpu_custom_call.1} parent=1 // pred_check
      _
    $region31: #{tpu_custom_call.1} parent=1 // pred_check_branch
      %147 = sbr.rel (0) target = $region33
    $region32: #{tpu_custom_call.1} parent=1 // pred_region
      %148 = dma.done [#allocation5], 128
    $region33: #{tpu_custom_call.1} parent=1 // pred_fallthru
      _
    %149 = vsyncpa [#allocation4], 1
    %150 = vsyncpa [#allocation7], 1
    %151 = vsyncpa [#allocation5], 1

</llo_original>
